<compile_context>
chip_gen: v7x
topology: tpu7x:2x2x1
jax: 0.10.0
libtpu: 0.0.40
codegen_flags: <defaults>
</compile_context>

<pallas_src>
import functools
import math

import jax
import jax.numpy as jnp
import numpy as np
from jax.experimental import pallas as pl
from jax.experimental.pallas import tpu as pltpu


# ----------------------------- Pallas kernel --------------------------------

def temporal_embed_kernel(idx_ref, table_ref, o_ref, *, offsets):
    """Fused multi-table embedding lookup + sum.

    idx_ref   : (L_blk, NF)    int32   time-feature indices (month, day, ...)
    table_ref : (V_pad, D_pad) float32 concatenated embedding tables
                               (row offset of table f is offsets[f])
    o_ref     : (L_blk, D_pad) float32 sum of the NF embedding rows
    """
    idx = idx_ref[...]                                  # (L_blk, NF) int32
    table = table_ref[...]                              # (V_pad, D_pad)
    l_blk = idx.shape[0]
    v_pad = table.shape[0]

    # Lane iota over the (padded) concatenated-table row axis.
    viota = jax.lax.broadcasted_iota(jnp.int32, (l_blk, v_pad), 1)

    # Multi-hot mask: integer compares OR'd, single final cast to f32.
    # Features occupy disjoint row ranges of the concatenated table, so OR is
    # exact for in-range indices (out-of-range indices are UB, as in torch).
    hot = (idx[:, 0:1] + offsets[0]) == viota
    for f in range(1, len(offsets)):                    # static loop, NF <= 5
        hot = jnp.logical_or(hot, (idx[:, f:f + 1] + offsets[f]) == viota)

    # Single MXU matmul = gather of NF rows + their sum, lane-dense result.
    o_ref[...] = jnp.dot(hot.astype(jnp.float32), table,
                         preferred_element_type=jnp.float32)


# ------------------------------ wrapper --------------------------------------

def _choose_row_block(n_rows, d_pad, v_pad, *, target=2048,
                      vmem_budget=14 * 1024 * 1024):
    """Largest row tile (multiple of 8) within a conservative VMEM budget.

    Budget counts: table x2 buffers, idx (lane-padded to 128) x2, output x2,
    plus the one-hot intermediate — safe under v5e's 16 MiB default scoped
    VMEM and leaves plenty of headroom on v6e/v7x.
    """
    fixed = 2 * v_pad * d_pad * 4                        # table, double-buffered
    per_row = 2 * 128 * 4 + 2 * d_pad * 4 + v_pad * 4    # idx + out + onehot
    budget_rows = max(8, (vmem_budget - fixed) // per_row)
    r8 = ((n_rows + 7) // 8) * 8                         # sublane multiple
    blk = min(target, budget_rows, r8)
    return max(8, (blk // 8) * 8)


def temporal_embedding(x_mark, table, num_features, offsets, d_model):
    """x_mark: (B, L, C>=NF) int; table: (V_pad, D_pad) -> (B, L, d_model) f32."""
    B, L, _ = x_mark.shape
    V_pad, D_pad = table.shape
    NF = num_features

    # Flatten (B, L) -> rows; pad rows to a multiple of the row tile.
    R = B * L
    idx = x_mark[:, :, :NF].astype(jnp.int32).reshape(R, NF)
    L_blk = _choose_row_block(R, D_pad, V_pad)
    R_pad = pl.cdiv(R, L_blk) * L_blk
    if R_pad != R:
        # Pad with index 0 (valid rows); padded outputs are sliced away below.
        idx = jnp.pad(idx, ((0, R_pad - R), (0, 0)))

    grid = (R_pad // L_blk,)
    kernel = functools.partial(temporal_embed_kernel, offsets=offsets)

    out = pl.pallas_call(
        kernel,
        out_shape=jax.ShapeDtypeStruct((R_pad, D_pad), jnp.float32),
        grid=grid,
        in_specs=[
            pl.BlockSpec((L_blk, NF), lambda r: (r, 0)),
            # Whole concatenated table, same block every step (VMEM-resident).
            pl.BlockSpec((V_pad, D_pad), lambda r: (0, 0)),
        ],
        out_specs=pl.BlockSpec((L_blk, D_pad), lambda r: (r, 0)),
        compiler_params=pltpu.CompilerParams(
            dimension_semantics=("parallel",)),
    )(idx, table)

    # Drop row padding and d_model lane padding, restore (B, L, d_model).
    return out[:R, :d_model].reshape(B, L, d_model)


# ---------------------------- parameter setup --------------------------------

def _fixed_embedding_table(c_in, d_model):
    """FixedEmbedding weight: frozen sinusoid of shape (c_in, d_model)."""
    position = np.arange(c_in, dtype=np.float32)[:, None]
    div_term = np.exp(np.arange(0, d_model, 2, dtype=np.float32)
                      * -(math.log(10000.0) / d_model))
    w = np.zeros((c_in, d_model), dtype=np.float32)
    sin_part = np.sin(position * div_term)
    cos_part = np.cos(position * div_term)
    w[:, 0::2] = sin_part[:, :w[:, 0::2].shape[1]]
    w[:, 1::2] = cos_part[:, :w[:, 1::2].shape[1]]
    return w


class TemporalEmbeddingPallas:
    """JAX/Pallas port of TemporalEmbedding(d_model, embed_type, freq)."""

    # column order in x: [month, day, weekday, hour, (minute)]
    _SIZES_H = [13, 32, 7, 24]        # month, day, weekday, hour sizes
    _MINUTE_SIZE = 4

    def __init__(self, d_model, embed_type='fixed', freq='h',
                 key=jax.random.PRNGKey(0)):
        sizes = list(self._SIZES_H)
        if freq == 't':
            sizes.append(self._MINUTE_SIZE)
        self.num_features = len(sizes)
        self.d_model = d_model

        tables = []
        if embed_type == 'fixed':
            for s in sizes:
                tables.append(_fixed_embedding_table(s, d_model))
        else:
            # TODO(synk): non-'fixed' path uses fresh frozen N(0,1) tables; it
            # cannot match trained torch nn.Embedding weights without loading.
            for i, s in enumerate(sizes):
                k = jax.random.fold_in(key, i)
                tables.append(np.asarray(
                    jax.random.normal(k, (s, d_model), dtype=jnp.float32)))

        offsets = np.concatenate([[0], np.cumsum(sizes[:-1])]).astype(np.int32)
        total = int(sum(sizes))
        v_pad = max(128, ((total + 127) // 128) * 128)   # MXU-friendly K dim
        d_pad = max(128, ((d_model + 127) // 128) * 128)  # lane-dense output dim
        big = np.zeros((v_pad, d_pad), dtype=np.float32)
        big[:total, :d_model] = np.concatenate(tables, axis=0)

        self.table = jnp.asarray(big)                    # (V_pad, D_pad)
        self.offsets = tuple(int(o) for o in offsets)    # static, baked in kernel
        self.tables = [jnp.asarray(t) for t in tables]   # kept for reference check

    def __call__(self, x_mark):
        return temporal_embedding(x_mark, self.table, self.num_features,
                                  self.offsets, self.d_model)


# ------------------------------ reference ------------------------------------

def temporal_reference(x_mark, tables):
    """Pure-JAX reference: sum of per-feature embedding lookups."""
    out = 0.0
    for f, tab in enumerate(tables):
        out = out + jnp.take(tab, x_mark[:, :, f].astype(jnp.int32), axis=0)
    return out


# -------------------------------- main ----------------------------------------

def _make_inputs(key, B, L):
    k_m, k_d, k_w, k_h = jax.random.split(key, 4)
    month = jax.random.randint(k_m, (B, L, 1), 0, 13, dtype=jnp.int32)
    day = jax.random.randint(k_d, (B, L, 1), 0, 32, dtype=jnp.int32)
    weekday = jax.random.randint(k_w, (B, L, 1), 0, 7, dtype=jnp.int32)
    hour = jax.random.randint(k_h, (B, L, 1), 0, 24, dtype=jnp.int32)
    return jnp.concatenate([month, day, weekday, hour], axis=-1)  # (B, L, 4)


if __name__ == "__main__":
    d_model = 32
    freq = 'h'                      # columns: [month, day, weekday, hour]
    key = jax.random.PRNGKey(0)

    model = TemporalEmbeddingPallas(d_model=d_model, embed_type='fixed',
                                    freq=freq)

    # Primary small check (B=2, L=8).
    B, L = 2, 8
    x_mark = _make_inputs(key, B, L)
    out = jax.block_until_ready(model(x_mark))
    assert out.shape == (B, L, d_model)
    ref = temporal_reference(x_mark, model.tables)
    np.testing.assert_allclose(np.asarray(out), np.asarray(ref),
                               rtol=1e-5, atol=1e-5)

    # Secondary check exercising the flattened-row tail padding path.
    B2, L2 = 3, 9                    # R = 27 -> padded to 32 rows internally
    x_mark2 = _make_inputs(jax.random.fold_in(key, 1), B2, L2)
    out2 = jax.block_until_ready(model(x_mark2))
    assert out2.shape == (B2, L2, d_model)
    ref2 = temporal_reference(x_mark2, model.tables)
    np.testing.assert_allclose(np.asarray(out2), np.asarray(ref2),
                               rtol=1e-5, atol=1e-5)

    print("KERNEL_OK")
</pallas_src>

<mosaic_0001>
module attributes {stable_mosaic.version = 11 : i64} {
  func.func @temporal_embed_kernel(%arg0: i32, %arg1: memref<16x4xi32, #tpu.memory_space<vmem>>, %arg2: memref<128x128xf32, #tpu.memory_space<vmem>>, %arg3: memref<16x128xf32, #tpu.memory_space<vmem>>) attributes {dimension_semantics = [#tpu.dimension_semantics<parallel>], iteration_bounds = array<i64: 1>, scalar_prefetch = 0 : i64, scratch_operands = 0 : i64, tpu.core_type = #tpu.core_type<tc>, window_params = [{transform_indices = @transform_0, window_bounds = array<i64: 16, 4>}, {pipeline_mode = #tpu.pipeline_mode<synchronous>, transform_indices = @transform_1, window_bounds = array<i64: 128, 128>}, {transform_indices = @transform_2, window_bounds = array<i64: 16, 128>}]} {
    %c0 = arith.constant 0 : index
    %c0_0 = arith.constant 0 : index
    %0 = vector.load %arg1[%c0, %c0_0] : memref<16x4xi32, #tpu.memory_space<vmem>>, vector<16x4xi32>
    %c0_1 = arith.constant 0 : index
    %c0_2 = arith.constant 0 : index
    %1 = vector.load %arg2[%c0_1, %c0_2] : memref<128x128xf32, #tpu.memory_space<vmem>>, vector<128x128xf32>
    %2 = tpu.iota {dimensions = array<i32: 1>} : vector<16x128xi32>
    %3 = vector.extract_strided_slice %0 {offsets = [0, 0], sizes = [16, 1], strides = [1, 1]} : vector<16x4xi32> to vector<16x1xi32>
    %c0_i32 = arith.constant 0 : i32
    %4 = vector.broadcast %c0_i32 : i32 to vector<16x1xi32>
    %5 = arith.addi %3, %4 : vector<16x1xi32>
    %6 = vector.broadcast %5 : vector<16x1xi32> to vector<16x128xi32>
    %7 = arith.cmpi eq, %6, %2 : vector<16x128xi32>
    %8 = vector.extract_strided_slice %0 {offsets = [0, 1], sizes = [16, 1], strides = [1, 1]} : vector<16x4xi32> to vector<16x1xi32>
    %c13_i32 = arith.constant 13 : i32
    %9 = vector.broadcast %c13_i32 : i32 to vector<16x1xi32>
    %10 = arith.addi %8, %9 : vector<16x1xi32>
    %11 = vector.broadcast %10 : vector<16x1xi32> to vector<16x128xi32>
    %12 = arith.cmpi eq, %11, %2 : vector<16x128xi32>
    %13 = arith.ori %7, %12 : vector<16x128xi1>
    %14 = vector.extract_strided_slice %0 {offsets = [0, 2], sizes = [16, 1], strides = [1, 1]} : vector<16x4xi32> to vector<16x1xi32>
    %c45_i32 = arith.constant 45 : i32
    %15 = vector.broadcast %c45_i32 : i32 to vector<16x1xi32>
    %16 = arith.addi %14, %15 : vector<16x1xi32>
    %17 = vector.broadcast %16 : vector<16x1xi32> to vector<16x128xi32>
    %18 = arith.cmpi eq, %17, %2 : vector<16x128xi32>
    %19 = arith.ori %13, %18 : vector<16x128xi1>
    %20 = vector.extract_strided_slice %0 {offsets = [0, 3], sizes = [16, 1], strides = [1, 1]} : vector<16x4xi32> to vector<16x1xi32>
    %c52_i32 = arith.constant 52 : i32
    %21 = vector.broadcast %c52_i32 : i32 to vector<16x1xi32>
    %22 = arith.addi %20, %21 : vector<16x1xi32>
    %23 = vector.broadcast %22 : vector<16x1xi32> to vector<16x128xi32>
    %24 = arith.cmpi eq, %23, %2 : vector<16x128xi32>
    %25 = arith.ori %19, %24 : vector<16x128xi1>
    %26 = arith.extui %25 : vector<16x128xi1> to vector<16x128xi32>
    %27 = arith.sitofp %26 : vector<16x128xi32> to vector<16x128xf32>
    %cst = arith.constant dense<0.000000e+00> : vector<16x128xf32>
    %28 = tpu.matmul %27, %1, %cst {dimension_numbers = #tpu.dot_dimension_numbers<[1], [0], [0], [1], [0, 0, 1, 1], [], []>} : vector<16x128xf32>, vector<128x128xf32>, vector<16x128xf32> -> vector<16x128xf32>
    %c0_3 = arith.constant 0 : index
    %c0_4 = arith.constant 0 : index
    %29 = vector.load %arg3[%c0_3, %c0_4] : memref<16x128xf32, #tpu.memory_space<vmem>>, vector<16x128xf32>
    tpu.vector_store %arg3[%c0_3, %c0_4], %28 {strides = array<i32>} : memref<16x128xf32, #tpu.memory_space<vmem>>, vector<16x128xf32>,
    return
  }
  func.func @transform_0(%arg0: i32) -> (i32, i32) {
    %c0_i32 = arith.constant 0 : i32
    %c0_i32_0 = arith.constant 0 : i32
    return %arg0, %c0_i32 : i32, i32
  }
  func.func @transform_1(%arg0: i32) -> (i32, i32) {
    %c0_i32 = arith.constant 0 : i32
    %c0_i32_0 = arith.constant 0 : i32
    %c0_i32_1 = arith.constant 0 : i32
    return %c0_i32, %c0_i32_0 : i32, i32
  }
  func.func @transform_2(%arg0: i32) -> (i32, i32) {
    %c0_i32 = arith.constant 0 : i32
    %c0_i32_0 = arith.constant 0 : i32
    return %arg0, %c0_i32 : i32, i32
  }
}

</mosaic_0001>

<llo_original>
// kernel: tpu_custom_call.1
$region0: #{tpu_custom_call.1}
  #allocation0 [shape = 'u32[]', space=smem, size = 0x4, offset = 0x4, fixed_abs, tag = 'smem constant byte address 0x4 - core index']
  #allocation1 [shape = 'u32[144,128]{1,0:T(1,128)}', space=vmem, size = 0x12000, scoped, tag = 'internal scratch']
  %s0 = inlined_call_operand.vmem [shape: s32[16,4], index: 0, kind: input, shape index: {}]
  %s1 = inlined_call_operand.hbm [shape: f32[128,128], index: 1, kind: input, shape index: {}]
  %s2 = inlined_call_operand.hbm [shape: f32[16,128], index: 2, kind: output, shape index: {}]
  %s3 = sld [smem:[#allocation0]]
  $region22: #{tpu_custom_call.1} parent=0
    _
  %s5 = ssub.s32 1, %s3
  %s6 = scalar_select 0, %s5, %s3
  $region1: #{tpu_custom_call.1} parent=0
    #allocation2 [shape = 'u8[65536]{0}', space=vmem, size = 0x10000, scoped, tag = 'input window, operand 1, single buffered']
    #allocation3 [shape = 's32[1]{0}', space=sflag, size = 0x4, scoped, tag = 'scoped memory for tpu_custom_call.1']
    #allocation4 [shape = 's32[1]{0}', space=sflag, size = 0x4, scoped, tag = 'scoped memory for tpu_custom_call.1']
    #allocation5 [shape = 'u8[8192]{0}', space=vmem, size = 0x2000, scoped, tag = 'output window, operand 0, single buffered']
    %7 = vsyncpa [#allocation3], 0
    %8 = vsyncpa [#allocation4], 0
    // Predicated region
    $region2: #{tpu_custom_call.1} parent=1 // pred_check
      _
    $region3: #{tpu_custom_call.1} parent=1 // pred_check_branch
      %10 = sbr.rel (0) target = $region5
    $region4: #{tpu_custom_call.1} parent=1 // pred_region
      _
    $region5: #{tpu_custom_call.1} parent=1 // pred_fallthru
      _
    // Predicated region
    $region6: #{tpu_custom_call.1} parent=1 // pred_check
      _
    $region7: #{tpu_custom_call.1} parent=1 // pred_check_branch
      %12 = sbr.rel (0) target = $region9
    $region8: #{tpu_custom_call.1} parent=1 // pred_region
      %s14 = ssub.s32 2048, 2048
      %15 = vsyncadd [#allocation3], %s14
      %s16 = sshll.u32 [#allocation2], 4
      %s17 = int_to_ptr.vmem [resolvable:$true] %s16
      %22 = dma.hbm_to_vmem [thread:$0]  %s1, 2048, %s17, [#allocation3], 128, 128, 8
    $region9: #{tpu_custom_call.1} parent=1 // pred_fallthru
      _
    // Predicated region
    $region10: #{tpu_custom_call.1} parent=1 // pred_check
      _
    $region11: #{tpu_custom_call.1} parent=1 // pred_check_branch
      %24 = sbr.rel (0) target = $region13
    $region12: #{tpu_custom_call.1} parent=1 // pred_region
      %25 = dma.done [#allocation3], 2048
    $region13: #{tpu_custom_call.1} parent=1 // pred_fallthru
      _
    %v26 = vld [vmem:[%s0] sm:$0xff]
    %v27 = vld [vmem:[%s0 + $0x8] sm:$0xff]
    %v28 = vld [vmem:[#allocation2] sm:$0xff]
    %v29 = vld [vmem:[#allocation2 + $0x8] sm:$0xff]
    %v30 = vld [vmem:[#allocation2 + $0x10] sm:$0xff]
    %v31 = vld [vmem:[#allocation2 + $0x18] sm:$0xff]
    %v32 = vld [vmem:[#allocation2 + $0x20] sm:$0xff]
    %v33 = vld [vmem:[#allocation2 + $0x28] sm:$0xff]
    %v34 = vld [vmem:[#allocation2 + $0x30] sm:$0xff]
    %v35 = vld [vmem:[#allocation2 + $0x38] sm:$0xff]
    %v36 = vld [vmem:[#allocation2 + $0x40] sm:$0xff]
    %v37 = vld [vmem:[#allocation2 + $0x48] sm:$0xff]
    %v38 = vld [vmem:[#allocation2 + $0x50] sm:$0xff]
    %v39 = vld [vmem:[#allocation2 + $0x58] sm:$0xff]
    %v40 = vld [vmem:[#allocation2 + $0x60] sm:$0xff]
    %v41 = vld [vmem:[#allocation2 + $0x68] sm:$0xff]
    %v42 = vld [vmem:[#allocation2 + $0x70] sm:$0xff]
    %v43 = vld [vmem:[#allocation2 + $0x78] sm:$0xff]
    %v44 = vlaneseq
    %v45 = vand.u32 %v44, 127
    %46 = vset.pattern.permute.xlu0 0
    %47 = vperm.xlu0 %46, %v26
    %v48 = vpop.permute.xlu0 %47
    %49 = vset.pattern.permute.xlu0 0
    %50 = vperm.xlu0 %49, %v27
    %v51 = vpop.permute.xlu0 %50
    %vm52 = vcmp.eq.s32.totalorder %v48, %v45
    %vm53 = vcmp.eq.s32.totalorder %v51, %v45
    %v54 = vadd.s32 %v26, 13
    %v55 = vadd.s32 %v27, 13
    %56 = vset.pattern.permute.xlu0 1
    %57 = vperm.xlu0 %56, %v54
    %v58 = vpop.permute.xlu0 %57
    %59 = vset.pattern.permute.xlu0 1
    %60 = vperm.xlu0 %59, %v55
    %v61 = vpop.permute.xlu0 %60
    %vm62 = vcmp.eq.s32.totalorder %v58, %v45
    %vm63 = vcmp.eq.s32.totalorder %v61, %v45
    %vm64 = vmor %vm52, %vm62
    %vm65 = vmor %vm53, %vm63
    %v66 = vadd.s32 %v26, 45
    %v67 = vadd.s32 %v27, 45
    %68 = vset.pattern.permute.xlu0 2
    %69 = vperm.xlu0 %68, %v66
    %v70 = vpop.permute.xlu0 %69
    %71 = vset.pattern.permute.xlu0 2
    %72 = vperm.xlu0 %71, %v67
    %v73 = vpop.permute.xlu0 %72
    %vm74 = vcmp.eq.s32.totalorder %v70, %v45
    %vm75 = vcmp.eq.s32.totalorder %v73, %v45
    %vm76 = vmor %vm64, %vm74
    %vm77 = vmor %vm65, %vm75
    %v78 = vadd.s32 %v26, 52
    %v79 = vadd.s32 %v27, 52
    %80 = vset.pattern.permute.xlu0 3
    %81 = vperm.xlu0 %80, %v78
    %v82 = vpop.permute.xlu0 %81
    %83 = vset.pattern.permute.xlu0 3
    %84 = vperm.xlu0 %83, %v79
    %v85 = vpop.permute.xlu0 %84
    %vm86 = vcmp.eq.s32.totalorder %v82, %v45
    %vm87 = vcmp.eq.s32.totalorder %v85, %v45
    %vm88 = vmor %vm76, %vm86
    %vm89 = vmor %vm77, %vm87
    %v90 = vsel %vm88, 1, 0
    %v91 = vsel %vm89, 1, 0
    %v92 = vcvt.s32.f32 %v90
    %v93 = vcvt.s32.f32 %v91
    %94 = vmatprep.subr.mxu0 0.0
    %95 = vmatpush1.msra.mxu0 %v28
    %96 = vmatprep.subr.mxu0 0.0
    %97 = vmatpush1.msra.mxu0 %v29
    %98 = vmatprep.subr.mxu0 0.0
    %99 = vmatpush1.msra.mxu0 %v30
    %100 = vmatprep.subr.mxu0 0.0
    %101 = vmatpush1.msra.mxu0 %v31
    %102 = vmatprep.subr.mxu0 0.0
    %103 = vmatpush1.msra.mxu0 %v32
    %104 = vmatprep.subr.mxu0 0.0
    %105 = vmatpush1.msra.mxu0 %v33
    %106 = vmatprep.subr.mxu0 0.0
    %107 = vmatpush1.msra.mxu0 %v34
    %108 = vmatprep.subr.mxu0 0.0
    %109 = vmatpush1.msra.mxu0 %v35
    %110 = vmatprep.subr.mxu0 0.0
    %111 = vmatpush1.msra.mxu0 %v36
    %112 = vmatprep.subr.mxu0 0.0
    %113 = vmatpush1.msra.mxu0 %v37
    %114 = vmatprep.subr.mxu0 0.0
    %115 = vmatpush1.msra.mxu0 %v38
    %116 = vmatprep.subr.mxu0 0.0
    %117 = vmatpush1.msra.mxu0 %v39
    %118 = vmatprep.subr.mxu0 0.0
    %119 = vmatpush1.msra.mxu0 %v40
    %120 = vmatprep.subr.mxu0 0.0
    %121 = vmatpush1.msra.mxu0 %v41
    %122 = vmatprep.subr.mxu0 0.0
    %123 = vmatpush1.msra.mxu0 %v42
    %124 = vmatprep.subr.mxu0 0.0
    %125 = vmatpush1.msra.mxu0 %v43
    %126 = vmatprep.subr.mxu0 0.0
    %127 = vmatpush1.msra.mxu0 0.0
    %128 = vmatprep.subr.mxu0 0.0
    %129 = vmatpush1.msra.mxu0 0.0
    %130 = vmatprep.subr.mxu0 0.0
    %131 = vmatpush1.msra.mxu0 0.0
    %132 = vmatprep.subr.mxu0 0.0
    %133 = vmatpush1.msra.mxu0 0.0
    %134 = vmatprep.subr.mxu0 0.0
    %135 = vmatpush1.msra.mxu0 0.0
    %136 = vmatprep.subr.mxu0 0.0
    %137 = vmatpush1.msra.mxu0 0.0
    %138 = vmatprep.subr.mxu0 0.0
    %139 = vmatpush1.msra.mxu0 0.0
    %140 = vmatprep.subr.mxu0 0.0
    %141 = vmatpush1.msra.mxu0 0.0
    %142 = vmatprep.subr.mxu0 0.0
    %143 = vmatpush1.msra.mxu0 0.0
    %144 = vmatprep.subr.mxu0 0.0
    %145 = vmatpush1.msra.mxu0 0.0
    %146 = vmatprep.subr.mxu0 0.0
    %147 = vmatpush1.msra.mxu0 0.0
    %148 = vmatprep.subr.mxu0 0.0
    %149 = vmatpush1.msra.mxu0 0.0
    %150 = vmatprep.subr.mxu0 0.0
    %151 = vmatpush1.msra.mxu0 0.0
    %152 = vmatprep.subr.mxu0 0.0
    %153 = vmatpush1.msra.mxu0 0.0
    %154 = vmatprep.subr.mxu0 0.0
    %155 = vmatpush1.msra.mxu0 0.0
    %156 = vmatprep.subr.mxu0 0.0
    %157 = vmatpush1.msra.mxu0 0.0
    %158 = vmatprep.mubr.f32.mxu0 0.0
    %159 = vmatmul.mubr.f32.gmra.mrb[0].mxu0 %v92
    %v160 = vpop.f32.mrb[0].mxu0
    %v161 = vadd.f32 0.0, %v160
    %v162 = vpop.f32.mrb[0].mxu0
    %163 = vmatprep.mubr.f32.mxu0 0.0
    %164 = vmatmul.mubr.f32.gmra.mrb[0].mxu0 %v93
    %v165 = vpop.f32.mrb[0].mxu0
    %v166 = vadd.f32 0.0, %v165
    %v167 = vpop.f32.mrb[0].mxu0
    %168 = vdwg.mxu0
    %169 = vst [vmem:[#allocation5] sm:$0xff] %v161
    %170 = vst [vmem:[#allocation5 + $0x8] sm:$0xff] %v166
    // Predicated region
    $region14: #{tpu_custom_call.1} parent=1 // pred_check
      _
    $region15: #{tpu_custom_call.1} parent=1 // pred_check_branch
      %172 = sbr.rel (0) target = $region17
    $region16: #{tpu_custom_call.1} parent=1 // pred_region
      %s174 = ssub.s32 256, 256
      %175 = vsyncadd [#allocation4], %s174
      %s176 = sshll.u32 [#allocation5], 4
      %s177 = int_to_ptr.vmem [resolvable:$true] %s176
      %182 = dma.vmem_to_hbm [thread:$0]  %s177, 256, %s2, [#allocation4], 128, 128, 8
    $region17: #{tpu_custom_call.1} parent=1 // pred_fallthru
      _
    // Predicated region
    $region18: #{tpu_custom_call.1} parent=1 // pred_check
      _
    $region19: #{tpu_custom_call.1} parent=1 // pred_check_branch
      %184 = sbr.rel (0) target = $region21
    $region20: #{tpu_custom_call.1} parent=1 // pred_region
      %185 = dma.done [#allocation4], 256
    $region21: #{tpu_custom_call.1} parent=1 // pred_fallthru
      _
    %186 = vsyncpa [#allocation3], 1
    %187 = vsyncpa [#allocation4], 1

</llo_original>
